<compile_context>
chip_gen: v5e
topology: v5e:2x2
jax: 0.10.0
libtpu: 0.0.40
codegen_flags: <defaults>
</compile_context>

<pallas_src>
import functools

import jax
import jax.numpy as jnp
from jax.experimental import pallas as pl
from jax.experimental.pallas import tpu as pltpu


_LANES = 128          # TPU lane width
_TILE_BATCH = 8192    # default rows (lanes) per grid step; multiple of 128
_MIN_TILE = 8 * _LANES  # 1024


def _mlp_kernel(xt_ref, *refs, num_hidden):
    """Fused MLP forward for one batch tile, batch-on-lanes layout.

    xt_ref : (in_dim, TILE_BATCH) mxu_dtype   — x^T tile (streamed)
    refs = (W0^T, b0, ..., W_{H-1}^T, b_{H-1}, w_last_col, b_last, out_ref)
      W_i^T      : (out_i, in_i)  mxu_dtype, VMEM-resident across grid steps
      b_i        : (out_i, 1)     f32
      w_last_col : (hidden, 1)    f32  (final Linear(hidden, 1) weight as a column)
      b_last     : (1, 1)         f32
      out_ref    : (1, TILE_BATCH) f32 lane-dense output row
    """
    out_ref = refs[-1]
    w_last_ref = refs[-3]
    b_last_ref = refs[-2]

    ht = xt_ref[...]                       # (in_dim, T), already in MXU dtype
    for i in range(num_hidden):
        wt = refs[2 * i][...]              # (out, in)  MXU operand, resident
        b = refs[2 * i + 1][...]           # (out, 1)   f32
        # MXU matmul with batch on the N/lane axis; f32 accumulation.
        acc = jnp.dot(wt, ht.astype(wt.dtype), preferred_element_type=jnp.float32)
        ht = jnp.maximum(acc + b, 0.0)     # bias + ReLU in f32, full 128-lane width
        # Dropout: identity in eval mode.

    # Final Linear(hidden, 1): VPU multiply + sublane (XLU) reduce.
    # Result is already lane-dense (1, TILE_BATCH): no relayout needed.
    y = jnp.sum(ht * w_last_ref[...], axis=0, keepdims=True)   # (1, T) f32
    out_ref[...] = (y + b_last_ref[...]).astype(out_ref.dtype)


def _prepare_params(params, mxu_dtype):
    """One-time (hoisted) layout/dtype prep of the parameters.

    Hidden-layer weights -> transposed (out, in) in mxu_dtype (MXU operands);
    biases -> f32 (out, 1) columns (lane-broadcast against (out, T) activations).
    Final Linear(hidden, 1): weight -> f32 (hidden, 1) column, bias -> f32 (1, 1).
    """
    flat = []
    for w, b in params[:-1]:
        flat.append(jnp.asarray(w, jnp.float32).T.astype(mxu_dtype))   # (out, in)
        flat.append(jnp.asarray(b, jnp.float32).reshape(-1, 1))        # (out, 1)
    w_last, b_last = params[-1]
    flat.append(jnp.asarray(w_last, jnp.float32).reshape(-1, 1))       # (hidden, 1)
    flat.append(jnp.asarray(b_last, jnp.float32).reshape(1, 1))        # (1, 1)
    return flat


def regression_net_forward(x, params, *, tile_batch=_TILE_BATCH,
                           mxu_dtype=jnp.bfloat16):
    """params: list of (W, b); W: (in, out), b: (1, out) — pre-transposed vs torch."""
    batch, in_dim = x.shape

    # Tile selection: multiple of 128, large enough to amortize per-step
    # overhead, but small enough that the grid has >= 2 steps when the batch
    # allows (so v7x's 2 TensorCores both get work via the "parallel" axis).
    tile_batch = max(_MIN_TILE, _LANES * int(pl.cdiv(int(tile_batch), _LANES)))
    if batch > _MIN_TILE:
        two_way = _MIN_TILE * int(pl.cdiv(batch, 2 * _MIN_TILE))
        tile_batch = min(tile_batch, max(_MIN_TILE, two_way))
    else:
        tile_batch = _MIN_TILE

    num_tiles = int(pl.cdiv(batch, tile_batch))
    batch_p = num_tiles * tile_batch

    # Batch-on-lanes layout: stream x^T = (in_dim, batch).  The transpose and
    # the MXU-dtype cast fuse into one small XLA op (x is only `in_dim` wide);
    # the kernel-side tile (in_dim, tile_batch) then has no lane padding.
    xt = jnp.transpose(jnp.asarray(x, jnp.float32)).astype(mxu_dtype)
    if batch_p != batch:
        xt = jnp.pad(xt, ((0, 0), (0, batch_p - batch)))  # zero-pad tail columns

    flat = _prepare_params(params, mxu_dtype)
    num_hidden = len(params) - 1

    def resident_spec(arr):
        # Same block every grid step -> stays VMEM-resident, no re-DMA.
        return pl.BlockSpec(arr.shape, lambda i: (0,) * arr.ndim)

    in_specs = [pl.BlockSpec((in_dim, tile_batch), lambda i: (0, i))]
    in_specs += [resident_spec(a) for a in flat]
    out_specs = pl.BlockSpec((1, tile_batch), lambda i: (0, i))

    kernel = functools.partial(_mlp_kernel, num_hidden=num_hidden)

    out_row = pl.pallas_call(
        kernel,
        grid=(num_tiles,),
        in_specs=in_specs,
        out_specs=out_specs,
        out_shape=jax.ShapeDtypeStruct((1, batch_p), jnp.float32),
        compiler_params=pltpu.CompilerParams(
            # Megacore split of the batch axis on v7x (no-op on v5e/v6e).
            dimension_semantics=("parallel",),
            # Explicit VMEM budget: tiny here (~1-2 MiB of tiles + weights),
            # 32 MiB is safe on all of v5e/v6e/v7x.
            vmem_limit_bytes=32 * 1024 * 1024,
        ),
    )(xt, *flat)

    # (1, batch_p) lane-dense row -> (batch, 1), dropping padded columns.
    return out_row.reshape(batch_p, 1)[:batch]


def reference_forward(x, params, mxu_dtype=jnp.bfloat16):
    """Pure-JAX reference mirroring the kernel's math (same MXU operand dtype)."""
    h = jnp.asarray(x, jnp.float32)
    for w, b in params[:-1]:
        h = jnp.dot(h.astype(mxu_dtype), jnp.asarray(w, jnp.float32).astype(mxu_dtype),
                    preferred_element_type=jnp.float32)
        h = jnp.maximum(h + jnp.asarray(b, jnp.float32).reshape(1, -1), 0.0)
    w_last, b_last = params[-1]
    y = jnp.sum(h * jnp.asarray(w_last, jnp.float32).reshape(1, -1),
                axis=-1, keepdims=True)
    return y + jnp.asarray(b_last, jnp.float32).reshape(1, 1)


def init_params(key, input_dim, hidden_dim, num_layers):
    """Deterministic init mirroring the layer shapes of RegressionNet."""
    dims = [input_dim] + [hidden_dim] * num_layers + [1]
    params = []
    for i in range(len(dims) - 1):
        key, kw, kb = jax.random.split(key, 3)
        bound = 1.0 / jnp.sqrt(dims[i])
        w = jax.random.uniform(kw, (dims[i], dims[i + 1]),
                               minval=-bound, maxval=bound, dtype=jnp.float32)
        b = jax.random.uniform(kb, (1, dims[i + 1]),
                               minval=-bound, maxval=bound, dtype=jnp.float32)
        params.append((w, b))
    return params


if __name__ == "__main__":
    # RegressionNet(input_dim=16, hidden_dim=32, num_layers=3, dropout=0.1), eval mode.
    batch, input_dim, hidden_dim, num_layers = 8, 16, 32, 3

    key = jax.random.PRNGKey(0)
    key, kx = jax.random.split(key)
    x = jax.random.normal(kx, (batch, input_dim), dtype=jnp.float32)
    params = init_params(key, input_dim, hidden_dim, num_layers)

    out = jax.block_until_ready(regression_net_forward(x, params))
    ref = reference_forward(x, params)
    assert out.shape == (batch, 1)
    assert jnp.allclose(out, ref, atol=5e-3, rtol=5e-3), \
        float(jnp.max(jnp.abs(out - ref)))

    # Multi-tile + non-divisible batch: exercises the grid (>= 2 steps so both
    # v7x TensorCores work), resident weights, and the tail-padding path.
    key, kx2 = jax.random.split(key)
    x2 = jax.random.normal(kx2, (2500, input_dim), dtype=jnp.float32)
    out2 = jax.block_until_ready(regression_net_forward(x2, params))
    ref2 = reference_forward(x2, params)
    assert out2.shape == (2500, 1)
    assert jnp.allclose(out2, ref2, atol=5e-3, rtol=5e-3), \
        float(jnp.max(jnp.abs(out2 - ref2)))

    print("KERNEL_OK")
</pallas_src>

<mosaic_0001>
module attributes {stable_mosaic.version = 11 : i64} {
  func.func @_mlp_kernel(%arg0: i32, %arg1: memref<16x1024xbf16, #tpu.memory_space<vmem>>, %arg2: memref<32x16xbf16, #tpu.memory_space<vmem>>, %arg3: memref<32x1xf32, #tpu.memory_space<vmem>>, %arg4: memref<32x32xbf16, #tpu.memory_space<vmem>>, %arg5: memref<32x1xf32, #tpu.memory_space<vmem>>, %arg6: memref<32x32xbf16, #tpu.memory_space<vmem>>, %arg7: memref<32x1xf32, #tpu.memory_space<vmem>>, %arg8: memref<32x1xf32, #tpu.memory_space<vmem>>, %arg9: memref<1x1xf32, #tpu.memory_space<vmem>>, %arg10: memref<1x1024xf32, #tpu.memory_space<vmem>>) attributes {dimension_semantics = [#tpu.dimension_semantics<parallel>], iteration_bounds = array<i64: 1>, scalar_prefetch = 0 : i64, scratch_operands = 0 : i64, tpu.core_type = #tpu.core_type<tc>, window_params = [{transform_indices = @transform_0, window_bounds = array<i64: 16, 1024>}, {pipeline_mode = #tpu.pipeline_mode<synchronous>, transform_indices = @transform_1, window_bounds = array<i64: 32, 16>}, {pipeline_mode = #tpu.pipeline_mode<synchronous>, transform_indices = @transform_2, window_bounds = array<i64: 32, 1>}, {pipeline_mode = #tpu.pipeline_mode<synchronous>, transform_indices = @transform_3, window_bounds = array<i64: 32, 32>}, {pipeline_mode = #tpu.pipeline_mode<synchronous>, transform_indices = @transform_4, window_bounds = array<i64: 32, 1>}, {pipeline_mode = #tpu.pipeline_mode<synchronous>, transform_indices = @transform_5, window_bounds = array<i64: 32, 32>}, {pipeline_mode = #tpu.pipeline_mode<synchronous>, transform_indices = @transform_6, window_bounds = array<i64: 32, 1>}, {pipeline_mode = #tpu.pipeline_mode<synchronous>, transform_indices = @transform_7, window_bounds = array<i64: 32, 1>}, {pipeline_mode = #tpu.pipeline_mode<synchronous>, transform_indices = @transform_8, window_bounds = array<i64: 1, 1>}, {transform_indices = @transform_9, window_bounds = array<i64: 1, 1024>}]} {
    %c0 = arith.constant 0 : index
    %c0_0 = arith.constant 0 : index
    %0 = vector.load %arg1[%c0, %c0_0] : memref<16x1024xbf16, #tpu.memory_space<vmem>>, vector<16x1024xbf16>
    %c0_1 = arith.constant 0 : index
    %c0_2 = arith.constant 0 : index
    %1 = vector.load %arg2[%c0_1, %c0_2] : memref<32x16xbf16, #tpu.memory_space<vmem>>, vector<32x16xbf16>
    %c0_3 = arith.constant 0 : index
    %c0_4 = arith.constant 0 : index
    %2 = vector.load %arg3[%c0_3, %c0_4] : memref<32x1xf32, #tpu.memory_space<vmem>>, vector<32x1xf32>
    %cst = arith.constant dense<0.000000e+00> : vector<32x1024xf32>
    %3 = tpu.matmul %1, %0, %cst {dimension_numbers = #tpu.dot_dimension_numbers<[1], [0], [0], [1], [0, 0, 1, 1], [], []>} : vector<32x16xbf16>, vector<16x1024xbf16>, vector<32x1024xf32> -> vector<32x1024xf32>
    %4 = vector.broadcast %2 : vector<32x1xf32> to vector<32x1024xf32>
    %5 = arith.addf %3, %4 : vector<32x1024xf32>
    %cst_5 = arith.constant 0.000000e+00 : f32
    %6 = vector.broadcast %cst_5 : f32 to vector<32x1024xf32>
    %7 = arith.maximumf %5, %6 : vector<32x1024xf32>
    %c0_6 = arith.constant 0 : index
    %c0_7 = arith.constant 0 : index
    %8 = vector.load %arg4[%c0_6, %c0_7] : memref<32x32xbf16, #tpu.memory_space<vmem>>, vector<32x32xbf16>
    %c0_8 = arith.constant 0 : index
    %c0_9 = arith.constant 0 : index
    %9 = vector.load %arg5[%c0_8, %c0_9] : memref<32x1xf32, #tpu.memory_space<vmem>>, vector<32x1xf32>
    %10 = arith.truncf %7 : vector<32x1024xf32> to vector<32x1024xbf16>
    %cst_10 = arith.constant dense<0.000000e+00> : vector<32x1024xf32>
    %11 = tpu.matmul %8, %10, %cst_10 {dimension_numbers = #tpu.dot_dimension_numbers<[1], [0], [0], [1], [0, 0, 1, 1], [], []>} : vector<32x32xbf16>, vector<32x1024xbf16>, vector<32x1024xf32> -> vector<32x1024xf32>
    %12 = vector.broadcast %9 : vector<32x1xf32> to vector<32x1024xf32>
    %13 = arith.addf %11, %12 : vector<32x1024xf32>
    %cst_11 = arith.constant 0.000000e+00 : f32
    %14 = vector.broadcast %cst_11 : f32 to vector<32x1024xf32>
    %15 = arith.maximumf %13, %14 : vector<32x1024xf32>
    %c0_12 = arith.constant 0 : index
    %c0_13 = arith.constant 0 : index
    %16 = vector.load %arg6[%c0_12, %c0_13] : memref<32x32xbf16, #tpu.memory_space<vmem>>, vector<32x32xbf16>
    %c0_14 = arith.constant 0 : index
    %c0_15 = arith.constant 0 : index
    %17 = vector.load %arg7[%c0_14, %c0_15] : memref<32x1xf32, #tpu.memory_space<vmem>>, vector<32x1xf32>
    %18 = arith.truncf %15 : vector<32x1024xf32> to vector<32x1024xbf16>
    %cst_16 = arith.constant dense<0.000000e+00> : vector<32x1024xf32>
    %19 = tpu.matmul %16, %18, %cst_16 {dimension_numbers = #tpu.dot_dimension_numbers<[1], [0], [0], [1], [0, 0, 1, 1], [], []>} : vector<32x32xbf16>, vector<32x1024xbf16>, vector<32x1024xf32> -> vector<32x1024xf32>
    %20 = vector.broadcast %17 : vector<32x1xf32> to vector<32x1024xf32>
    %21 = arith.addf %19, %20 : vector<32x1024xf32>
    %cst_17 = arith.constant 0.000000e+00 : f32
    %22 = vector.broadcast %cst_17 : f32 to vector<32x1024xf32>
    %23 = arith.maximumf %21, %22 : vector<32x1024xf32>
    %c0_18 = arith.constant 0 : index
    %c0_19 = arith.constant 0 : index
    %24 = vector.load %arg8[%c0_18, %c0_19] : memref<32x1xf32, #tpu.memory_space<vmem>>, vector<32x1xf32>
    %25 = vector.broadcast %24 : vector<32x1xf32> to vector<32x1024xf32>
    %26 = arith.mulf %23, %25 : vector<32x1024xf32>
    %cst_20 = arith.constant dense<0.000000e+00> : vector<1024xf32>
    %27 = vector.multi_reduction <add>, %26, %cst_20 [0] : vector<32x1024xf32> to vector<1024xf32>
    %28 = vector.shape_cast %27 : vector<1024xf32> to vector<1x1024xf32>
    %c0_21 = arith.constant 0 : index
    %c0_22 = arith.constant 0 : index
    %29 = vector.load %arg9[%c0_21, %c0_22] : memref<1x1xf32, #tpu.memory_space<vmem>>, vector<1x1xf32>
    %30 = vector.broadcast %29 : vector<1x1xf32> to vector<1x1024xf32>
    %31 = arith.addf %28, %30 : vector<1x1024xf32>
    %c0_23 = arith.constant 0 : index
    %c0_24 = arith.constant 0 : index
    %32 = vector.load %arg10[%c0_23, %c0_24] : memref<1x1024xf32, #tpu.memory_space<vmem>>, vector<1x1024xf32>
    tpu.vector_store %arg10[%c0_23, %c0_24], %31 {strides = array<i32>} : memref<1x1024xf32, #tpu.memory_space<vmem>>, vector<1x1024xf32>,
    return
  }
  func.func @transform_0(%arg0: i32) -> (i32, i32) {
    %c0_i32 = arith.constant 0 : i32
    %c0_i32_0 = arith.constant 0 : i32
    return %c0_i32, %arg0 : i32, i32
  }
  func.func @transform_1(%arg0: i32) -> (i32, i32) {
    %c0_i32 = arith.constant 0 : i32
    %c0_i32_0 = arith.constant 0 : i32
    %c0_i32_1 = arith.constant 0 : i32
    return %c0_i32, %c0_i32_0 : i32, i32
  }
  func.func @transform_2(%arg0: i32) -> (i32, i32) {
    %c0_i32 = arith.constant 0 : i32
    %c0_i32_0 = arith.constant 0 : i32
    %c0_i32_1 = arith.constant 0 : i32
    return %c0_i32, %c0_i32_0 : i32, i32
  }
  func.func @transform_3(%arg0: i32) -> (i32, i32) {
    %c0_i32 = arith.constant 0 : i32
    %c0_i32_0 = arith.constant 0 : i32
    %c0_i32_1 = arith.constant 0 : i32
    return %c0_i32, %c0_i32_0 : i32, i32
  }
  func.func @transform_4(%arg0: i32) -> (i32, i32) {
    %c0_i32 = arith.constant 0 : i32
    %c0_i32_0 = arith.constant 0 : i32
    %c0_i32_1 = arith.constant 0 : i32
    return %c0_i32, %c0_i32_0 : i32, i32
  }
  func.func @transform_5(%arg0: i32) -> (i32, i32) {
    %c0_i32 = arith.constant 0 : i32
    %c0_i32_0 = arith.constant 0 : i32
    %c0_i32_1 = arith.constant 0 : i32
    return %c0_i32, %c0_i32_0 : i32, i32
  }
  func.func @transform_6(%arg0: i32) -> (i32, i32) {
    %c0_i32 = arith.constant 0 : i32
    %c0_i32_0 = arith.constant 0 : i32
    %c0_i32_1 = arith.constant 0 : i32
    return %c0_i32, %c0_i32_0 : i32, i32
  }
  func.func @transform_7(%arg0: i32) -> (i32, i32) {
    %c0_i32 = arith.constant 0 : i32
    %c0_i32_0 = arith.constant 0 : i32
    %c0_i32_1 = arith.constant 0 : i32
    return %c0_i32, %c0_i32_0 : i32, i32
  }
  func.func @transform_8(%arg0: i32) -> (i32, i32) {
    %c0_i32 = arith.constant 0 : i32
    %c0_i32_0 = arith.constant 0 : i32
    %c0_i32_1 = arith.constant 0 : i32
    return %c0_i32, %c0_i32_0 : i32, i32
  }
  func.func @transform_9(%arg0: i32) -> (i32, i32) {
    %c0_i32 = arith.constant 0 : i32
    %c0_i32_0 = arith.constant 0 : i32
    return %c0_i32, %arg0 : i32, i32
  }
}

</mosaic_0001>

<llo_original>
// kernel: tpu_custom_call.1
$region0: #{tpu_custom_call.1}
  #allocation0 [shape = 'u32[]', space=smem, size = 0x4, offset = 0x4, fixed_abs, tag = 'smem constant byte address 0x4 - core index']
  #allocation1 [shape = 'u32[72,128]{1,0:T(1,128)}', space=vmem, size = 0x9000, scoped, tag = 'internal scratch']
  #allocation2 [shape = 'f32[1,1]{1,0:T(1,128)S(1)}', space=vmem, size = 0x200, scoped, tag = 'scoped memory for tpu_custom_call.1']
  %s0 = inlined_call_operand.vmem [shape: bf16[16,1024], index: 0, kind: input, shape index: {}]
  %s1 = inlined_call_operand.vmem [shape: bf16[32,16], index: 1, kind: input, shape index: {}]
  %s2 = inlined_call_operand.vmem [shape: f32[32,1], index: 2, kind: input, shape index: {}]
  %s3 = inlined_call_operand.vmem [shape: bf16[32,32], index: 3, kind: input, shape index: {}]
  %s4 = inlined_call_operand.vmem [shape: f32[32,1], index: 4, kind: input, shape index: {}]
  %s5 = inlined_call_operand.vmem [shape: bf16[32,32], index: 5, kind: input, shape index: {}]
  %s6 = inlined_call_operand.vmem [shape: f32[32,1], index: 6, kind: input, shape index: {}]
  %s7 = inlined_call_operand.vmem [shape: f32[32,1], index: 7, kind: input, shape index: {}]
  %s8 = inlined_call_operand.<no memory space> [shape: f32[1,1], index: 8, kind: input, shape index: {}]
  %s9 = inlined_call_operand.hbm [shape: f32[1,1024], index: 9, kind: output, shape index: {}]
  %s10 = sld [smem:[#allocation0]]
  $region46: #{tpu_custom_call.1} parent=0
    _
  %s12 = ssub.s32 1, %s10
  %s13 = scalar_select 0, %s12, %s10
  %v14 = vstv %s8
  %15 = vst [vmem:[#allocation2] sm:$0x1] %v14
  $region1: #{tpu_custom_call.1} parent=0
    #allocation3 [shape = 'u8[4096]{0}', space=vmem, size = 0x1000, scoped, tag = 'output window, operand 0, single buffered']
    #allocation4 [shape = 's32[1]{0}', space=sflag, size = 0x4, scoped, tag = 'scoped memory for tpu_custom_call.1']
    %16 = vsyncpa [#allocation4], 0
    // Predicated region
    $region2: #{tpu_custom_call.1} parent=1 // pred_check
      _
    $region3: #{tpu_custom_call.1} parent=1 // pred_check_branch
      %18 = sbr.rel (0) target = $region5
    $region4: #{tpu_custom_call.1} parent=1 // pred_region
      _
    $region5: #{tpu_custom_call.1} parent=1 // pred_fallthru
      _
    // Predicated region
    $region6: #{tpu_custom_call.1} parent=1 // pred_check
      _
    $region7: #{tpu_custom_call.1} parent=1 // pred_check_branch
      %20 = sbr.rel (0) target = $region9
    $region8: #{tpu_custom_call.1} parent=1 // pred_region
      _
    $region9: #{tpu_custom_call.1} parent=1 // pred_fallthru
      _
    // Predicated region
    $region10: #{tpu_custom_call.1} parent=1 // pred_check
      _
    $region11: #{tpu_custom_call.1} parent=1 // pred_check_branch
      %22 = sbr.rel (0) target = $region13
    $region12: #{tpu_custom_call.1} parent=1 // pred_region
      _
    $region13: #{tpu_custom_call.1} parent=1 // pred_fallthru
      _
    // Predicated region
    $region14: #{tpu_custom_call.1} parent=1 // pred_check
      _
    $region15: #{tpu_custom_call.1} parent=1 // pred_check_branch
      %24 = sbr.rel (0) target = $region17
    $region16: #{tpu_custom_call.1} parent=1 // pred_region
      _
    $region17: #{tpu_custom_call.1} parent=1 // pred_fallthru
      _
    // Predicated region
    $region18: #{tpu_custom_call.1} parent=1 // pred_check
      _
    $region19: #{tpu_custom_call.1} parent=1 // pred_check_branch
      %26 = sbr.rel (0) target = $region21
    $region20: #{tpu_custom_call.1} parent=1 // pred_region
      _
    $region21: #{tpu_custom_call.1} parent=1 // pred_fallthru
      _
    // Predicated region
    $region22: #{tpu_custom_call.1} parent=1 // pred_check
      _
    $region23: #{tpu_custom_call.1} parent=1 // pred_check_branch
      %28 = sbr.rel (0) target = $region25
    $region24: #{tpu_custom_call.1} parent=1 // pred_region
      _
    $region25: #{tpu_custom_call.1} parent=1 // pred_fallthru
      _
    // Predicated region
    $region26: #{tpu_custom_call.1} parent=1 // pred_check
      _
    $region27: #{tpu_custom_call.1} parent=1 // pred_check_branch
      %30 = sbr.rel (0) target = $region29
    $region28: #{tpu_custom_call.1} parent=1 // pred_region
      _
    $region29: #{tpu_custom_call.1} parent=1 // pred_fallthru
      _
    // Predicated region
    $region30: #{tpu_custom_call.1} parent=1 // pred_check
      _
    $region31: #{tpu_custom_call.1} parent=1 // pred_check_branch
      %32 = sbr.rel (0) target = $region33
    $region32: #{tpu_custom_call.1} parent=1 // pred_region
      _
    $region33: #{tpu_custom_call.1} parent=1 // pred_fallthru
      _
    // Predicated region
    $region34: #{tpu_custom_call.1} parent=1 // pred_check
      _
    $region35: #{tpu_custom_call.1} parent=1 // pred_check_branch
      %34 = sbr.rel (0) target = $region37
    $region36: #{tpu_custom_call.1} parent=1 // pred_region
      _
    $region37: #{tpu_custom_call.1} parent=1 // pred_fallthru
      _
    %v36 = vld [vmem:[%s0] sm:$0xff]
    %v37 = vld [vmem:[%s0 + $0x8] sm:$0xff]
    %v38 = vld [vmem:[%s0 + $0x10] sm:$0xff]
    %v39 = vld [vmem:[%s0 + $0x18] sm:$0xff]
    %v40 = vld [vmem:[%s0 + $0x20] sm:$0xff]
    %v41 = vld [vmem:[%s0 + $0x28] sm:$0xff]
    %v42 = vld [vmem:[%s0 + $0x30] sm:$0xff]
    %v43 = vld [vmem:[%s0 + $0x38] sm:$0xff]
    %v44 = vld [vmem:[%s1] sm:$0xf]
    %v45 = vld [vmem:[%s1 + $0x4] sm:$0xf]
    %v46 = vld [vmem:[%s1 + $0x8] sm:$0xf]
    %v47 = vld [vmem:[%s1 + $0xc] sm:$0xf]
    %v48 = vld [vmem:[%s2] sm:$0xff]
    %v49 = vld [vmem:[%s2 + $0x8] sm:$0xff]
    %v50 = vld [vmem:[%s2 + $0x10] sm:$0xff]
    %v51 = vld [vmem:[%s2 + $0x18] sm:$0xff]
    %53 = vset.pattern.permute.xlu0 0
    %54 = vperm.xlu0 %53, %v48
    %v55 = vpop.permute.xlu0 %54
    %58 = vset.pattern.permute.xlu0 0
    %59 = vperm.xlu0 %58, %v49
    %v60 = vpop.permute.xlu0 %59
    %63 = vset.pattern.permute.xlu0 0
    %64 = vperm.xlu0 %63, %v50
    %v65 = vpop.permute.xlu0 %64
    %68 = vset.pattern.permute.xlu0 0
    %69 = vperm.xlu0 %68, %v51
    %v70 = vpop.permute.xlu0 %69
    %v76 = vunpack.c.l.b16 %v44
    %v77 = vunpack.c.l.b16 %v45
    %v78 = vunpack.c.l.b16 %v46
    %v79 = vunpack.c.l.b16 %v47
    %v80 = vpack.c.b16 %v77, %v76
    %v81 = vpack.c.b16 %v79, %v78
    %v90 = vunpack.c.l.b16 %v36
    %v91 = vunpack.c.h.b16 %v36
    %v92 = vunpack.c.l.b16 %v37
    %v93 = vunpack.c.h.b16 %v37
    %v94 = vunpack.c.l.b16 %v38
    %v95 = vunpack.c.h.b16 %v38
    %v96 = vunpack.c.l.b16 %v39
    %v97 = vunpack.c.h.b16 %v39
    %v98 = vunpack.c.l.b16 %v40
    %v99 = vunpack.c.h.b16 %v40
    %v100 = vunpack.c.l.b16 %v41
    %v101 = vunpack.c.h.b16 %v41
    %v102 = vunpack.c.l.b16 %v42
    %v103 = vunpack.c.h.b16 %v42
    %v104 = vunpack.c.l.b16 %v43
    %v105 = vunpack.c.h.b16 %v43
    %v106 = vpack.c.b16 %v98, %v90
    %v107 = vpack.c.b16 %v99, %v91
    %v108 = vpack.c.b16 %v100, %v92
    %v109 = vpack.c.b16 %v101, %v93
    %v110 = vpack.c.b16 %v102, %v94
    %v111 = vpack.c.b16 %v103, %v95
    %v112 = vpack.c.b16 %v104, %v96
    %v113 = vpack.c.b16 %v105, %v97
    %vm122 = vcmask 130048
    %v124 = vsel %vm122, %v80, 0
    %v127 = vsel %vm122, %v81, 0
    %129 = vmatpush.bf16.msra.mxu0 0
    %130 = vmatpush.bf16.msra.mxu0 0
    %131 = vmatpush.bf16.msra.mxu0 0
    %132 = vmatpush.bf16.msra.mxu0 0
    %133 = vmatpush.bf16.msra.mxu0 0
    %134 = vmatpush.bf16.msra.mxu0 0
    %135 = vmatpush.bf16.msra.mxu0 0
    %136 = vmatpush.bf16.msra.mxu0 %v106
    %137 = vmatmul.bf16.gmra.mxu0 %v124
    %v138 = vpop.f32.mrf.mxu0
    %v139 = vadd.f32 %v55, %v138
    %v140 = vpop.f32.mrf.mxu0
    %v141 = vadd.f32 %v60, %v140
    %142 = vmatmul.bf16.gmra.mxu0 %v127
    %v143 = vpop.f32.mrf.mxu0
    %v144 = vadd.f32 %v65, %v143
    %v145 = vpop.f32.mrf.mxu0
    %v146 = vadd.f32 %v70, %v145
    %147 = vdwg.mxu0
    %148 = vmatpush.bf16.msra.mxu0 0
    %149 = vmatpush.bf16.msra.mxu0 0
    %150 = vmatpush.bf16.msra.mxu0 0
    %151 = vmatpush.bf16.msra.mxu0 0
    %152 = vmatpush.bf16.msra.mxu0 0
    %153 = vmatpush.bf16.msra.mxu0 0
    %154 = vmatpush.bf16.msra.mxu0 0
    %155 = vmatpush.bf16.msra.mxu0 %v107
    %156 = vmatmul.bf16.gmra.mxu0 %v124
    %v157 = vpop.f32.mrf.mxu0
    %v158 = vadd.f32 %v55, %v157
    %v159 = vpop.f32.mrf.mxu0
    %v160 = vadd.f32 %v60, %v159
    %161 = vmatmul.bf16.gmra.mxu0 %v127
    %v162 = vpop.f32.mrf.mxu0
    %v163 = vadd.f32 %v65, %v162
    %v164 = vpop.f32.mrf.mxu0
    %v165 = vadd.f32 %v70, %v164
    %166 = vdwg.mxu0
    %167 = vmatpush.bf16.msra.mxu0 0
    %168 = vmatpush.bf16.msra.mxu0 0
    %169 = vmatpush.bf16.msra.mxu0 0
    %170 = vmatpush.bf16.msra.mxu0 0
    %171 = vmatpush.bf16.msra.mxu0 0
    %172 = vmatpush.bf16.msra.mxu0 0
    %173 = vmatpush.bf16.msra.mxu0 0
    %174 = vmatpush.bf16.msra.mxu0 %v108
    %175 = vmatmul.bf16.gmra.mxu0 %v124
    %v176 = vpop.f32.mrf.mxu0
    %v177 = vadd.f32 %v55, %v176
    %v178 = vpop.f32.mrf.mxu0
    %v179 = vadd.f32 %v60, %v178
    %180 = vmatmul.bf16.gmra.mxu0 %v127
    %v181 = vpop.f32.mrf.mxu0
    %v182 = vadd.f32 %v65, %v181
    %v183 = vpop.f32.mrf.mxu0
    %v184 = vadd.f32 %v70, %v183
    %185 = vdwg.mxu0
    %186 = vmatpush.bf16.msra.mxu0 0
    %187 = vmatpush.bf16.msra.mxu0 0
    %188 = vmatpush.bf16.msra.mxu0 0
    %189 = vmatpush.bf16.msra.mxu0 0
    %190 = vmatpush.bf16.msra.mxu0 0
    %191 = vmatpush.bf16.msra.mxu0 0
    %192 = vmatpush.bf16.msra.mxu0 0
    %193 = vmatpush.bf16.msra.mxu0 %v109
    %194 = vmatmul.bf16.gmra.mxu0 %v124
    %v195 = vpop.f32.mrf.mxu0
    %v196 = vadd.f32 %v55, %v195
    %v197 = vpop.f32.mrf.mxu0
    %v198 = vadd.f32 %v60, %v197
    %199 = vmatmul.bf16.gmra.mxu0 %v127
    %v200 = vpop.f32.mrf.mxu0
    %v201 = vadd.f32 %v65, %v200
    %v202 = vpop.f32.mrf.mxu0
    %v203 = vadd.f32 %v70, %v202
    %204 = vdwg.mxu0
    %205 = vmatpush.bf16.msra.mxu0 0
    %206 = vmatpush.bf16.msra.mxu0 0
    %207 = vmatpush.bf16.msra.mxu0 0
    %208 = vmatpush.bf16.msra.mxu0 0
    %209 = vmatpush.bf16.msra.mxu0 0
    %210 = vmatpush.bf16.msra.mxu0 0
    %211 = vmatpush.bf16.msra.mxu0 0
    %212 = vmatpush.bf16.msra.mxu0 %v110
    %213 = vmatmul.bf16.gmra.mxu0 %v124
    %v214 = vpop.f32.mrf.mxu0
    %v215 = vadd.f32 %v55, %v214
    %v216 = vpop.f32.mrf.mxu0
    %v217 = vadd.f32 %v60, %v216
    %218 = vmatmul.bf16.gmra.mxu0 %v127
    %v219 = vpop.f32.mrf.mxu0
    %v220 = vadd.f32 %v65, %v219
    %v221 = vpop.f32.mrf.mxu0
    %v222 = vadd.f32 %v70, %v221
    %223 = vdwg.mxu0
    %224 = vmatpush.bf16.msra.mxu0 0
    %225 = vmatpush.bf16.msra.mxu0 0
    %226 = vmatpush.bf16.msra.mxu0 0
    %227 = vmatpush.bf16.msra.mxu0 0
    %228 = vmatpush.bf16.msra.mxu0 0
    %229 = vmatpush.bf16.msra.mxu0 0
    %230 = vmatpush.bf16.msra.mxu0 0
    %231 = vmatpush.bf16.msra.mxu0 %v111
    %232 = vmatmul.bf16.gmra.mxu0 %v124
    %v233 = vpop.f32.mrf.mxu0
    %v234 = vadd.f32 %v55, %v233
    %v235 = vpop.f32.mrf.mxu0
    %v236 = vadd.f32 %v60, %v235
    %237 = vmatmul.bf16.gmra.mxu0 %v127
    %v238 = vpop.f32.mrf.mxu0
    %v239 = vadd.f32 %v65, %v238
    %v240 = vpop.f32.mrf.mxu0
    %v241 = vadd.f32 %v70, %v240
    %242 = vdwg.mxu0
    %243 = vmatpush.bf16.msra.mxu0 0
    %244 = vmatpush.bf16.msra.mxu0 0
    %245 = vmatpush.bf16.msra.mxu0 0
    %246 = vmatpush.bf16.msra.mxu0 0
    %247 = vmatpush.bf16.msra.mxu0 0
    %248 = vmatpush.bf16.msra.mxu0 0
    %249 = vmatpush.bf16.msra.mxu0 0
    %250 = vmatpush.bf16.msra.mxu0 %v112
    %251 = vmatmul.bf16.gmra.mxu0 %v124
    %v252 = vpop.f32.mrf.mxu0
    %v253 = vadd.f32 %v55, %v252
    %v254 = vpop.f32.mrf.mxu0
    %v255 = vadd.f32 %v60, %v254
    %256 = vmatmul.bf16.gmra.mxu0 %v127
    %v257 = vpop.f32.mrf.mxu0
    %v258 = vadd.f32 %v65, %v257
    %v259 = vpop.f32.mrf.mxu0
    %v260 = vadd.f32 %v70, %v259
    %261 = vdwg.mxu0
    %262 = vmatpush.bf16.msra.mxu0 0
    %263 = vmatpush.bf16.msra.mxu0 0
    %264 = vmatpush.bf16.msra.mxu0 0
    %265 = vmatpush.bf16.msra.mxu0 0
    %266 = vmatpush.bf16.msra.mxu0 0
    %267 = vmatpush.bf16.msra.mxu0 0
    %268 = vmatpush.bf16.msra.mxu0 0
    %269 = vmatpush.bf16.msra.mxu0 %v113
    %270 = vmatmul.bf16.gmra.mxu0 %v124
    %v271 = vpop.f32.mrf.mxu0
    %v272 = vadd.f32 %v55, %v271
    %v273 = vpop.f32.mrf.mxu0
    %v274 = vadd.f32 %v60, %v273
    %275 = vmatmul.bf16.gmra.mxu0 %v127
    %v276 = vpop.f32.mrf.mxu0
    %v277 = vadd.f32 %v65, %v276
    %v278 = vpop.f32.mrf.mxu0
    %v279 = vadd.f32 %v70, %v278
    %280 = vdwg.mxu0
    %v281 = vmax.f32 %v139, 0.0
    %v282 = vmax.f32 %v158, 0.0
    %v283 = vmax.f32 %v177, 0.0
    %v284 = vmax.f32 %v196, 0.0
    %v285 = vmax.f32 %v215, 0.0
    %v286 = vmax.f32 %v234, 0.0
    %v287 = vmax.f32 %v253, 0.0
    %v288 = vmax.f32 %v272, 0.0
    %v289 = vmax.f32 %v141, 0.0
    %v290 = vmax.f32 %v160, 0.0
    %v291 = vmax.f32 %v179, 0.0
    %v292 = vmax.f32 %v198, 0.0
    %v293 = vmax.f32 %v217, 0.0
    %v294 = vmax.f32 %v236, 0.0
    %v295 = vmax.f32 %v255, 0.0
    %v296 = vmax.f32 %v274, 0.0
    %v297 = vmax.f32 %v144, 0.0
    %v298 = vmax.f32 %v163, 0.0
    %v299 = vmax.f32 %v182, 0.0
    %v300 = vmax.f32 %v201, 0.0
    %v301 = vmax.f32 %v220, 0.0
    %v302 = vmax.f32 %v239, 0.0
    %v303 = vmax.f32 %v258, 0.0
    %v304 = vmax.f32 %v277, 0.0
    %v305 = vmax.f32 %v146, 0.0
    %v306 = vmax.f32 %v165, 0.0
    %v307 = vmax.f32 %v184, 0.0
    %v308 = vmax.f32 %v203, 0.0
    %v309 = vmax.f32 %v222, 0.0
    %v310 = vmax.f32 %v241, 0.0
    %v311 = vmax.f32 %v260, 0.0
    %v312 = vmax.f32 %v279, 0.0
    %v313 = vld [vmem:[%s3] sm:$0xf]
    %v314 = vld [vmem:[%s3 + $0x4] sm:$0xf]
    %v315 = vld [vmem:[%s3 + $0x8] sm:$0xf]
    %v316 = vld [vmem:[%s3 + $0xc] sm:$0xf]
    %v317 = vld [vmem:[%s4] sm:$0xff]
    %v318 = vld [vmem:[%s4 + $0x8] sm:$0xff]
    %v319 = vld [vmem:[%s4 + $0x10] sm:$0xff]
    %v320 = vld [vmem:[%s4 + $0x18] sm:$0xff]
    %v321 = vpack.c.bf16 %v289, %v281
    %v322 = vpack.c.bf16 %v290, %v282
    %v323 = vpack.c.bf16 %v291, %v283
    %v324 = vpack.c.bf16 %v292, %v284
    %v325 = vpack.c.bf16 %v293, %v285
    %v326 = vpack.c.bf16 %v294, %v286
    %v327 = vpack.c.bf16 %v295, %v287
    %v328 = vpack.c.bf16 %v296, %v288
    %v329 = vpack.c.bf16 %v305, %v297
    %v330 = vpack.c.bf16 %v306, %v298
    %v331 = vpack.c.bf16 %v307, %v299
    %v332 = vpack.c.bf16 %v308, %v300
    %v333 = vpack.c.bf16 %v309, %v301
    %v334 = vpack.c.bf16 %v310, %v302
    %v335 = vpack.c.bf16 %v311, %v303
    %v336 = vpack.c.bf16 %v312, %v304
    %338 = vset.pattern.permute.xlu0 0
    %339 = vperm.xlu0 %338, %v317
    %v340 = vpop.permute.xlu0 %339
    %343 = vset.pattern.permute.xlu0 0
    %344 = vperm.xlu0 %343, %v318
    %v345 = vpop.permute.xlu0 %344
    %348 = vset.pattern.permute.xlu0 0
    %349 = vperm.xlu0 %348, %v319
    %v350 = vpop.permute.xlu0 %349
    %353 = vset.pattern.permute.xlu0 0
    %354 = vperm.xlu0 %353, %v320
    %v355 = vpop.permute.xlu0 %354
    %v361 = vunpack.c.l.b16 %v313
    %v362 = vunpack.c.l.b16 %v314
    %v363 = vunpack.c.l.b16 %v315
    %v364 = vunpack.c.l.b16 %v316
    %v365 = vpack.c.b16 %v362, %v361
    %v366 = vpack.c.b16 %v364, %v363
    %vm367 = vcmask 261120
    %v369 = vsel %vm367, %v365, 0
    %v372 = vsel %vm367, %v366, 0
    %374 = vmatpush.bf16.msra.mxu0 0
    %375 = vmatpush.bf16.msra.mxu0 0
    %376 = vmatpush.bf16.msra.mxu0 0
    %377 = vmatpush.bf16.msra.mxu0 0
    %378 = vmatpush.bf16.msra.mxu0 0
    %379 = vmatpush.bf16.msra.mxu0 0
    %380 = vmatpush.bf16.msra.mxu0 %v329
    %381 = vmatpush.bf16.msra.mxu0 %v321
    %382 = vmatmul.bf16.gmra.mxu0 %v369
    %v383 = vpop.f32.mrf.mxu0
    %v384 = vadd.f32 %v340, %v383
    %v385 = vpop.f32.mrf.mxu0
    %v386 = vadd.f32 %v345, %v385
    %387 = vmatmul.bf16.gmra.mxu0 %v372
    %v388 = vpop.f32.mrf.mxu0
    %v389 = vadd.f32 %v350, %v388
    %v390 = vpop.f32.mrf.mxu0
    %v391 = vadd.f32 %v355, %v390
    %392 = vdwg.mxu0
    %393 = vmatpush.bf16.msra.mxu0 0
    %394 = vmatpush.bf16.msra.mxu0 0
    %395 = vmatpush.bf16.msra.mxu0 0
    %396 = vmatpush.bf16.msra.mxu0 0
    %397 = vmatpush.bf16.msra.mxu0 0
    %398 = vmatpush.bf16.msra.mxu0 0
    %399 = vmatpush.bf16.msra.mxu0 %v330
    %400 = vmatpush.bf16.msra.mxu0 %v322
    %401 = vmatmul.bf16.gmra.mxu0 %v369
    %v402 = vpop.f32.mrf.mxu0
    %v403 = vadd.f32 %v340, %v402
    %v404 = vpop.f32.mrf.mxu0
    %v405 = vadd.f32 %v345, %v404
    %406 = vmatmul.bf16.gmra.mxu0 %v372
    %v407 = vpop.f32.mrf.mxu0
    %v408 = vadd.f32 %v350, %v407
    %v409 = vpop.f32.mrf.mxu0
    %v410 = vadd.f32 %v355, %v409
    %411 = vdwg.mxu0
    %412 = vmatpush.bf16.msra.mxu0 0
    %413 = vmatpush.bf16.msra.mxu0 0
    %414 = vmatpush.bf16.msra.mxu0 0
    %415 = vmatpush.bf16.msra.mxu0 0
    %416 = vmatpush.bf16.msra.mxu0 0
    %417 = vmatpush.bf16.msra.mxu0 0
    %418 = vmatpush.bf16.msra.mxu0 %v331
    %419 = vmatpush.bf16.msra.mxu0 %v323
    %420 = vmatmul.bf16.gmra.mxu0 %v369
    %v421 = vpop.f32.mrf.mxu0
    %v422 = vadd.f32 %v340, %v421
    %v423 = vpop.f32.mrf.mxu0
    %v424 = vadd.f32 %v345, %v423
    %425 = vmatmul.bf16.gmra.mxu0 %v372
    %v426 = vpop.f32.mrf.mxu0
    %v427 = vadd.f32 %v350, %v426
    %v428 = vpop.f32.mrf.mxu0
    %v429 = vadd.f32 %v355, %v428
    %430 = vdwg.mxu0
    %431 = vmatpush.bf16.msra.mxu0 0
    %432 = vmatpush.bf16.msra.mxu0 0
    %433 = vmatpush.bf16.msra.mxu0 0
    %434 = vmatpush.bf16.msra.mxu0 0
    %435 = vmatpush.bf16.msra.mxu0 0
    %436 = vmatpush.bf16.msra.mxu0 0
    %437 = vmatpush.bf16.msra.mxu0 %v332
    %438 = vmatpush.bf16.msra.mxu0 %v324
    %439 = vmatmul.bf16.gmra.mxu0 %v369
    %v440 = vpop.f32.mrf.mxu0
    %v441 = vadd.f32 %v340, %v440
    %v442 = vpop.f32.mrf.mxu0
    %v443 = vadd.f32 %v345, %v442
    %444 = vmatmul.bf16.gmra.mxu0 %v372
    %v445 = vpop.f32.mrf.mxu0
    %v446 = vadd.f32 %v350, %v445
    %v447 = vpop.f32.mrf.mxu0
    %v448 = vadd.f32 %v355, %v447
    %449 = vdwg.mxu0
    %450 = vmatpush.bf16.msra.mxu0 0
    %451 = vmatpush.bf16.msra.mxu0 0
    %452 = vmatpush.bf16.msra.mxu0 0
    %453 = vmatpush.bf16.msra.mxu0 0
    %454 = vmatpush.bf16.msra.mxu0 0
    %455 = vmatpush.bf16.msra.mxu0 0
    %456 = vmatpush.bf16.msra.mxu0 %v333
    %457 = vmatpush.bf16.msra.mxu0 %v325
    %458 = vmatmul.bf16.gmra.mxu0 %v369
    %v459 = vpop.f32.mrf.mxu0
    %v460 = vadd.f32 %v340, %v459
    %v461 = vpop.f32.mrf.mxu0
    %v462 = vadd.f32 %v345, %v461
    %463 = vmatmul.bf16.gmra.mxu0 %v372
    %v464 = vpop.f32.mrf.mxu0
    %v465 = vadd.f32 %v350, %v464
    %v466 = vpop.f32.mrf.mxu0
    %v467 = vadd.f32 %v355, %v466
    %468 = vdwg.mxu0
    %469 = vmatpush.bf16.msra.mxu0 0
    %470 = vmatpush.bf16.msra.mxu0 0
    %471 = vmatpush.bf16.msra.mxu0 0
    %472 = vmatpush.bf16.msra.mxu0 0
    %473 = vmatpush.bf16.msra.mxu0 0
    %474 = vmatpush.bf16.msra.mxu0 0
    %475 = vmatpush.bf16.msra.mxu0 %v334
    %476 = vmatpush.bf16.msra.mxu0 %v326
    %477 = vmatmul.bf16.gmra.mxu0 %v369
    %v478 = vpop.f32.mrf.mxu0
    %v479 = vadd.f32 %v340, %v478
    %v480 = vpop.f32.mrf.mxu0
    %v481 = vadd.f32 %v345, %v480
    %482 = vmatmul.bf16.gmra.mxu0 %v372
    %v483 = vpop.f32.mrf.mxu0
    %v484 = vadd.f32 %v350, %v483
    %v485 = vpop.f32.mrf.mxu0
    %v486 = vadd.f32 %v355, %v485
    %487 = vdwg.mxu0
    %488 = vmatpush.bf16.msra.mxu0 0
    %489 = vmatpush.bf16.msra.mxu0 0
    %490 = vmatpush.bf16.msra.mxu0 0
    %491 = vmatpush.bf16.msra.mxu0 0
    %492 = vmatpush.bf16.msra.mxu0 0
    %493 = vmatpush.bf16.msra.mxu0 0
    %494 = vmatpush.bf16.msra.mxu0 %v335
    %495 = vmatpush.bf16.msra.mxu0 %v327
    %496 = vmatmul.bf16.gmra.mxu0 %v369
    %v497 = vpop.f32.mrf.mxu0
    %v498 = vadd.f32 %v340, %v497
    %v499 = vpop.f32.mrf.mxu0
    %v500 = vadd.f32 %v345, %v499
    %501 = vmatmul.bf16.gmra.mxu0 %v372
    %v502 = vpop.f32.mrf.mxu0
    %v503 = vadd.f32 %v350, %v502
    %v504 = vpop.f32.mrf.mxu0
    %v505 = vadd.f32 %v355, %v504
    %506 = vdwg.mxu0
    %507 = vmatpush.bf16.msra.mxu0 0
    %508 = vmatpush.bf16.msra.mxu0 0
    %509 = vmatpush.bf16.msra.mxu0 0
    %510 = vmatpush.bf16.msra.mxu0 0
    %511 = vmatpush.bf16.msra.mxu0 0
    %512 = vmatpush.bf16.msra.mxu0 0
    %513 = vmatpush.bf16.msra.mxu0 %v336
    %514 = vmatpush.bf16.msra.mxu0 %v328
    %515 = vmatmul.bf16.gmra.mxu0 %v369
    %v516 = vpop.f32.mrf.mxu0
    %v517 = vadd.f32 %v340, %v516
    %v518 = vpop.f32.mrf.mxu0
    %v519 = vadd.f32 %v345, %v518
    %520 = vmatmul.bf16.gmra.mxu0 %v372
    %v521 = vpop.f32.mrf.mxu0
    %v522 = vadd.f32 %v350, %v521
    %v523 = vpop.f32.mrf.mxu0
    %v524 = vadd.f32 %v355, %v523
    %525 = vdwg.mxu0
    %v526 = vmax.f32 %v384, 0.0
    %v527 = vmax.f32 %v403, 0.0
    %v528 = vmax.f32 %v422, 0.0
    %v529 = vmax.f32 %v441, 0.0
    %v530 = vmax.f32 %v460, 0.0
    %v531 = vmax.f32 %v479, 0.0
    %v532 = vmax.f32 %v498, 0.0
    %v533 = vmax.f32 %v517, 0.0
    %v534 = vmax.f32 %v386, 0.0
    %v535 = vmax.f32 %v405, 0.0
    %v536 = vmax.f32 %v424, 0.0
    %v537 = vmax.f32 %v443, 0.0
    %v538 = vmax.f32 %v462, 0.0
    %v539 = vmax.f32 %v481, 0.0
    %v540 = vmax.f32 %v500, 0.0
    %v541 = vmax.f32 %v519, 0.0
    %v542 = vmax.f32 %v389, 0.0
    %v543 = vmax.f32 %v408, 0.0
    %v544 = vmax.f32 %v427, 0.0
    %v545 = vmax.f32 %v446, 0.0
    %v546 = vmax.f32 %v465, 0.0
    %v547 = vmax.f32 %v484, 0.0
    %v548 = vmax.f32 %v503, 0.0
    %v549 = vmax.f32 %v522, 0.0
    %v550 = vmax.f32 %v391, 0.0
    %v551 = vmax.f32 %v410, 0.0
    %v552 = vmax.f32 %v429, 0.0
    %v553 = vmax.f32 %v448, 0.0
    %v554 = vmax.f32 %v467, 0.0
    %v555 = vmax.f32 %v486, 0.0
    %v556 = vmax.f32 %v505, 0.0
    %v557 = vmax.f32 %v524, 0.0
    %v558 = vld [vmem:[%s5] sm:$0xf]
    %v559 = vld [vmem:[%s5 + $0x4] sm:$0xf]
    %v560 = vld [vmem:[%s5 + $0x8] sm:$0xf]
    %v561 = vld [vmem:[%s5 + $0xc] sm:$0xf]
    %v562 = vld [vmem:[%s6] sm:$0xff]
    %v563 = vld [vmem:[%s6 + $0x8] sm:$0xff]
    %v564 = vld [vmem:[%s6 + $0x10] sm:$0xff]
    %v565 = vld [vmem:[%s6 + $0x18] sm:$0xff]
    %v566 = vpack.c.bf16 %v534, %v526
    %v567 = vpack.c.bf16 %v535, %v527
    %v568 = vpack.c.bf16 %v536, %v528
    %v569 = vpack.c.bf16 %v537, %v529
    %v570 = vpack.c.bf16 %v538, %v530
    %v571 = vpack.c.bf16 %v539, %v531
    %v572 = vpack.c.bf16 %v540, %v532
    %v573 = vpack.c.bf16 %v541, %v533
    %v574 = vpack.c.bf16 %v550, %v542
    %v575 = vpack.c.bf16 %v551, %v543
    %v576 = vpack.c.bf16 %v552, %v544
    %v577 = vpack.c.bf16 %v553, %v545
    %v578 = vpack.c.bf16 %v554, %v546
    %v579 = vpack.c.bf16 %v555, %v547
    %v580 = vpack.c.bf16 %v556, %v548
    %v581 = vpack.c.bf16 %v557, %v549
    %583 = vset.pattern.permute.xlu0 0
    %584 = vperm.xlu0 %583, %v562
    %v585 = vpop.permute.xlu0 %584
    %588 = vset.pattern.permute.xlu0 0
    %589 = vperm.xlu0 %588, %v563
    %v590 = vpop.permute.xlu0 %589
    %593 = vset.pattern.permute.xlu0 0
    %594 = vperm.xlu0 %593, %v564
    %v595 = vpop.permute.xlu0 %594
    %598 = vset.pattern.permute.xlu0 0
    %599 = vperm.xlu0 %598, %v565
    %v600 = vpop.permute.xlu0 %599
    %v606 = vunpack.c.l.b16 %v558
    %v607 = vunpack.c.l.b16 %v559
    %v608 = vunpack.c.l.b16 %v560
    %v609 = vunpack.c.l.b16 %v561
    %v610 = vpack.c.b16 %v607, %v606
    %v611 = vpack.c.b16 %v609, %v608
    %v613 = vsel %vm367, %v610, 0
    %v616 = vsel %vm367, %v611, 0
    %618 = vmatpush.bf16.msra.mxu0 0
    %619 = vmatpush.bf16.msra.mxu0 0
    %620 = vmatpush.bf16.msra.mxu0 0
    %621 = vmatpush.bf16.msra.mxu0 0
    %622 = vmatpush.bf16.msra.mxu0 0
    %623 = vmatpush.bf16.msra.mxu0 0
    %624 = vmatpush.bf16.msra.mxu0 %v574
    %625 = vmatpush.bf16.msra.mxu0 %v566
    %626 = vmatmul.bf16.gmra.mxu0 %v613
    %v627 = vpop.f32.mrf.mxu0
    %v628 = vadd.f32 %v585, %v627
    %v629 = vpop.f32.mrf.mxu0
    %v630 = vadd.f32 %v590, %v629
    %631 = vmatmul.bf16.gmra.mxu0 %v616
    %v632 = vpop.f32.mrf.mxu0
    %v633 = vadd.f32 %v595, %v632
    %v634 = vpop.f32.mrf.mxu0
    %v635 = vadd.f32 %v600, %v634
    %636 = vdwg.mxu0
    %637 = vmatpush.bf16.msra.mxu0 0
    %638 = vmatpush.bf16.msra.mxu0 0
    %639 = vmatpush.bf16.msra.mxu0 0
    %640 = vmatpush.bf16.msra.mxu0 0
    %641 = vmatpush.bf16.msra.mxu0 0
    %642 = vmatpush.bf16.msra.mxu0 0
    %643 = vmatpush.bf16.msra.mxu0 %v575
    %644 = vmatpush.bf16.msra.mxu0 %v567
    %645 = vmatmul.bf16.gmra.mxu0 %v613
    %v646 = vpop.f32.mrf.mxu0
    %v647 = vadd.f32 %v585, %v646
    %v648 = vpop.f32.mrf.mxu0
    %v649 = vadd.f32 %v590, %v648
    %650 = vmatmul.bf16.gmra.mxu0 %v616
    %v651 = vpop.f32.mrf.mxu0
    %v652 = vadd.f32 %v595, %v651
    %v653 = vpop.f32.mrf.mxu0
    %v654 = vadd.f32 %v600, %v653
    %655 = vdwg.mxu0
    %656 = vmatpush.bf16.msra.mxu0 0
    %657 = vmatpush.bf16.msra.mxu0 0
    %658 = vmatpush.bf16.msra.mxu0 0
    %659 = vmatpush.bf16.msra.mxu0 0
    %660 = vmatpush.bf16.msra.mxu0 0
    %661 = vmatpush.bf16.msra.mxu0 0
    %662 = vmatpush.bf16.msra.mxu0 %v576
    %663 = vmatpush.bf16.msra.mxu0 %v568
    %664 = vmatmul.bf16.gmra.mxu0 %v613
    %v665 = vpop.f32.mrf.mxu0
    %v666 = vadd.f32 %v585, %v665
    %v667 = vpop.f32.mrf.mxu0
    %v668 = vadd.f32 %v590, %v667
    %669 = vmatmul.bf16.gmra.mxu0 %v616
    %v670 = vpop.f32.mrf.mxu0
    %v671 = vadd.f32 %v595, %v670
    %v672 = vpop.f32.mrf.mxu0
    %v673 = vadd.f32 %v600, %v672
    %674 = vdwg.mxu0
    %675 = vmatpush.bf16.msra.mxu0 0
    %676 = vmatpush.bf16.msra.mxu0 0
    %677 = vmatpush.bf16.msra.mxu0 0
    %678 = vmatpush.bf16.msra.mxu0 0
    %679 = vmatpush.bf16.msra.mxu0 0
    %680 = vmatpush.bf16.msra.mxu0 0
    %681 = vmatpush.bf16.msra.mxu0 %v577
    %682 = vmatpush.bf16.msra.mxu0 %v569
    %683 = vmatmul.bf16.gmra.mxu0 %v613
    %v684 = vpop.f32.mrf.mxu0
    %v685 = vadd.f32 %v585, %v684
    %v686 = vpop.f32.mrf.mxu0
    %v687 = vadd.f32 %v590, %v686
    %688 = vmatmul.bf16.gmra.mxu0 %v616
    %v689 = vpop.f32.mrf.mxu0
    %v690 = vadd.f32 %v595, %v689
    %v691 = vpop.f32.mrf.mxu0
    %v692 = vadd.f32 %v600, %v691
    %693 = vdwg.mxu0
    %694 = vmatpush.bf16.msra.mxu0 0
    %695 = vmatpush.bf16.msra.mxu0 0
    %696 = vmatpush.bf16.msra.mxu0 0
    %697 = vmatpush.bf16.msra.mxu0 0
    %698 = vmatpush.bf16.msra.mxu0 0
    %699 = vmatpush.bf16.msra.mxu0 0
    %700 = vmatpush.bf16.msra.mxu0 %v578
    %701 = vmatpush.bf16.msra.mxu0 %v570
    %702 = vmatmul.bf16.gmra.mxu0 %v613
    %v703 = vpop.f32.mrf.mxu0
    %v704 = vadd.f32 %v585, %v703
    %v705 = vpop.f32.mrf.mxu0
    %v706 = vadd.f32 %v590, %v705
    %707 = vmatmul.bf16.gmra.mxu0 %v616
    %v708 = vpop.f32.mrf.mxu0
    %v709 = vadd.f32 %v595, %v708
    %v710 = vpop.f32.mrf.mxu0
    %v711 = vadd.f32 %v600, %v710
    %712 = vdwg.mxu0
    %713 = vmatpush.bf16.msra.mxu0 0
    %714 = vmatpush.bf16.msra.mxu0 0
    %715 = vmatpush.bf16.msra.mxu0 0
    %716 = vmatpush.bf16.msra.mxu0 0
    %717 = vmatpush.bf16.msra.mxu0 0
    %718 = vmatpush.bf16.msra.mxu0 0
    %719 = vmatpush.bf16.msra.mxu0 %v579
    %720 = vmatpush.bf16.msra.mxu0 %v571
    %721 = vmatmul.bf16.gmra.mxu0 %v613
    %v722 = vpop.f32.mrf.mxu0
    %v723 = vadd.f32 %v585, %v722
    %v724 = vpop.f32.mrf.mxu0
    %v725 = vadd.f32 %v590, %v724
    %726 = vmatmul.bf16.gmra.mxu0 %v616
    %v727 = vpop.f32.mrf.mxu0
    %v728 = vadd.f32 %v595, %v727
    %v729 = vpop.f32.mrf.mxu0
    %v730 = vadd.f32 %v600, %v729
    %731 = vdwg.mxu0
    %732 = vmatpush.bf16.msra.mxu0 0
    %733 = vmatpush.bf16.msra.mxu0 0
    %734 = vmatpush.bf16.msra.mxu0 0
    %735 = vmatpush.bf16.msra.mxu0 0
    %736 = vmatpush.bf16.msra.mxu0 0
    %737 = vmatpush.bf16.msra.mxu0 0
    %738 = vmatpush.bf16.msra.mxu0 %v580
    %739 = vmatpush.bf16.msra.mxu0 %v572
    %740 = vmatmul.bf16.gmra.mxu0 %v613
    %v741 = vpop.f32.mrf.mxu0
    %v742 = vadd.f32 %v585, %v741
    %v743 = vpop.f32.mrf.mxu0
    %v744 = vadd.f32 %v590, %v743
    %745 = vmatmul.bf16.gmra.mxu0 %v616
    %v746 = vpop.f32.mrf.mxu0
    %v747 = vadd.f32 %v595, %v746
    %v748 = vpop.f32.mrf.mxu0
    %v749 = vadd.f32 %v600, %v748
    %750 = vdwg.mxu0
    %751 = vmatpush.bf16.msra.mxu0 0
    %752 = vmatpush.bf16.msra.mxu0 0
    %753 = vmatpush.bf16.msra.mxu0 0
    %754 = vmatpush.bf16.msra.mxu0 0
    %755 = vmatpush.bf16.msra.mxu0 0
    %756 = vmatpush.bf16.msra.mxu0 0
    %757 = vmatpush.bf16.msra.mxu0 %v581
    %758 = vmatpush.bf16.msra.mxu0 %v573
    %759 = vmatmul.bf16.gmra.mxu0 %v613
    %v760 = vpop.f32.mrf.mxu0
    %v761 = vadd.f32 %v585, %v760
    %v762 = vpop.f32.mrf.mxu0
    %v763 = vadd.f32 %v590, %v762
    %764 = vmatmul.bf16.gmra.mxu0 %v616
    %v765 = vpop.f32.mrf.mxu0
    %v766 = vadd.f32 %v595, %v765
    %v767 = vpop.f32.mrf.mxu0
    %v768 = vadd.f32 %v600, %v767
    %769 = vdwg.mxu0
    %v770 = vmax.f32 %v628, 0.0
    %v771 = vmax.f32 %v647, 0.0
    %v772 = vmax.f32 %v666, 0.0
    %v773 = vmax.f32 %v685, 0.0
    %v774 = vmax.f32 %v704, 0.0
    %v775 = vmax.f32 %v723, 0.0
    %v776 = vmax.f32 %v742, 0.0
    %v777 = vmax.f32 %v761, 0.0
    %v778 = vmax.f32 %v630, 0.0
    %v779 = vmax.f32 %v649, 0.0
    %v780 = vmax.f32 %v668, 0.0
    %v781 = vmax.f32 %v687, 0.0
    %v782 = vmax.f32 %v706, 0.0
    %v783 = vmax.f32 %v725, 0.0
    %v784 = vmax.f32 %v744, 0.0
    %v785 = vmax.f32 %v763, 0.0
    %v786 = vmax.f32 %v633, 0.0
    %v787 = vmax.f32 %v652, 0.0
    %v788 = vmax.f32 %v671, 0.0
    %v789 = vmax.f32 %v690, 0.0
    %v790 = vmax.f32 %v709, 0.0
    %v791 = vmax.f32 %v728, 0.0
    %v792 = vmax.f32 %v747, 0.0
    %v793 = vmax.f32 %v766, 0.0
    %v794 = vmax.f32 %v635, 0.0
    %v795 = vmax.f32 %v654, 0.0
    %v796 = vmax.f32 %v673, 0.0
    %v797 = vmax.f32 %v692, 0.0
    %v798 = vmax.f32 %v711, 0.0
    %v799 = vmax.f32 %v730, 0.0
    %v800 = vmax.f32 %v749, 0.0
    %v801 = vmax.f32 %v768, 0.0
    %v802 = vld [vmem:[%s7] sm:$0xff]
    %v803 = vld [vmem:[%s7 + $0x8] sm:$0xff]
    %v804 = vld [vmem:[%s7 + $0x10] sm:$0xff]
    %v805 = vld [vmem:[%s7 + $0x18] sm:$0xff]
    %807 = vset.pattern.permute.xlu0 0
    %808 = vperm.xlu0 %807, %v802
    %v809 = vpop.permute.xlu0 %808
    %812 = vset.pattern.permute.xlu0 0
    %813 = vperm.xlu0 %812, %v803
    %v814 = vpop.permute.xlu0 %813
    %817 = vset.pattern.permute.xlu0 0
    %818 = vperm.xlu0 %817, %v804
    %v819 = vpop.permute.xlu0 %818
    %822 = vset.pattern.permute.xlu0 0
    %823 = vperm.xlu0 %822, %v805
    %v824 = vpop.permute.xlu0 %823
    %v826 = vmul.f32 %v770, %v809
    %v827 = vmul.f32 %v771, %v809
    %v828 = vmul.f32 %v772, %v809
    %v829 = vmul.f32 %v773, %v809
    %v830 = vmul.f32 %v774, %v809
    %v831 = vmul.f32 %v775, %v809
    %v832 = vmul.f32 %v776, %v809
    %v833 = vmul.f32 %v777, %v809
    %v834 = vmul.f32 %v778, %v814
    %v835 = vmul.f32 %v779, %v814
    %v836 = vmul.f32 %v780, %v814
    %v837 = vmul.f32 %v781, %v814
    %v838 = vmul.f32 %v782, %v814
    %v839 = vmul.f32 %v783, %v814
    %v840 = vmul.f32 %v784, %v814
    %v841 = vmul.f32 %v785, %v814
    %v842 = vmul.f32 %v786, %v819
    %v843 = vmul.f32 %v787, %v819
    %v844 = vmul.f32 %v788, %v819
    %v845 = vmul.f32 %v789, %v819
    %v846 = vmul.f32 %v790, %v819
    %v847 = vmul.f32 %v791, %v819
    %v848 = vmul.f32 %v792, %v819
    %v849 = vmul.f32 %v793, %v819
    %v850 = vmul.f32 %v794, %v824
    %v851 = vmul.f32 %v795, %v824
    %v852 = vmul.f32 %v796, %v824
    %v853 = vmul.f32 %v797, %v824
    %v854 = vmul.f32 %v798, %v824
    %v855 = vmul.f32 %v799, %v824
    %v856 = vmul.f32 %v800, %v824
    %v857 = vmul.f32 %v801, %v824
    %v858 = vadd.f32 %v826, %v834
    %v859 = vadd.f32 %v858, %v842
    %v860 = vadd.f32 %v859, %v850
    %v861 = vrot.slane %v860, 4
    %v862 = vadd.f32 %v860, %v861
    %v863 = vrot.slane %v862, 2
    %v864 = vadd.f32 %v862, %v863
    %v865 = vrot.slane %v864, 1
    %v866 = vadd.f32 %v864, %v865
    %v867 = vadd.f32 %v827, %v835
    %v868 = vadd.f32 %v867, %v843
    %v869 = vadd.f32 %v868, %v851
    %v870 = vrot.slane %v869, 4
    %v871 = vadd.f32 %v869, %v870
    %v872 = vrot.slane %v871, 2
    %v873 = vadd.f32 %v871, %v872
    %v874 = vrot.slane %v873, 1
    %v875 = vadd.f32 %v873, %v874
    %v876 = vadd.f32 %v828, %v836
    %v877 = vadd.f32 %v876, %v844
    %v878 = vadd.f32 %v877, %v852
    %v879 = vrot.slane %v878, 4
    %v880 = vadd.f32 %v878, %v879
    %v881 = vrot.slane %v880, 2
    %v882 = vadd.f32 %v880, %v881
    %v883 = vrot.slane %v882, 1
    %v884 = vadd.f32 %v882, %v883
    %v885 = vadd.f32 %v829, %v837
    %v886 = vadd.f32 %v885, %v845
    %v887 = vadd.f32 %v886, %v853
    %v888 = vrot.slane %v887, 4
    %v889 = vadd.f32 %v887, %v888
    %v890 = vrot.slane %v889, 2
    %v891 = vadd.f32 %v889, %v890
    %v892 = vrot.slane %v891, 1
    %v893 = vadd.f32 %v891, %v892
    %v894 = vadd.f32 %v830, %v838
    %v895 = vadd.f32 %v894, %v846
    %v896 = vadd.f32 %v895, %v854
    %v897 = vrot.slane %v896, 4
    %v898 = vadd.f32 %v896, %v897
    %v899 = vrot.slane %v898, 2
    %v900 = vadd.f32 %v898, %v899
    %v901 = vrot.slane %v900, 1
    %v902 = vadd.f32 %v900, %v901
    %v903 = vadd.f32 %v831, %v839
    %v904 = vadd.f32 %v903, %v847
    %v905 = vadd.f32 %v904, %v855
    %v906 = vrot.slane %v905, 4
    %v907 = vadd.f32 %v905, %v906
    %v908 = vrot.slane %v907, 2
    %v909 = vadd.f32 %v907, %v908
    %v910 = vrot.slane %v909, 1
    %v911 = vadd.f32 %v909, %v910
    %v912 = vadd.f32 %v832, %v840
    %v913 = vadd.f32 %v912, %v848
    %v914 = vadd.f32 %v913, %v856
    %v915 = vrot.slane %v914, 4
    %v916 = vadd.f32 %v914, %v915
    %v917 = vrot.slane %v916, 2
    %v918 = vadd.f32 %v916, %v917
    %v919 = vrot.slane %v918, 1
    %v920 = vadd.f32 %v918, %v919
    %v921 = vadd.f32 %v833, %v841
    %v922 = vadd.f32 %v921, %v849
    %v923 = vadd.f32 %v922, %v857
    %v924 = vrot.slane %v923, 4
    %v925 = vadd.f32 %v923, %v924
    %v926 = vrot.slane %v925, 2
    %v927 = vadd.f32 %v925, %v926
    %v928 = vrot.slane %v927, 1
    %v929 = vadd.f32 %v927, %v928
    %v930 = vld [vmem:[#allocation2] sm:$0x1]
    %932 = vset.pattern.permute.xlu0 0
    %933 = vperm.xlu0 %932, %v930
    %v934 = vpop.permute.xlu0 %933
    %v936 = vperm.slane %v934, 0
    %v937 = vadd.f32 %v866, %v936
    %v938 = vadd.f32 %v875, %v936
    %v939 = vadd.f32 %v884, %v936
    %v940 = vadd.f32 %v893, %v936
    %v941 = vadd.f32 %v902, %v936
    %v942 = vadd.f32 %v911, %v936
    %v943 = vadd.f32 %v920, %v936
    %v944 = vadd.f32 %v929, %v936
    %v953 = vrot.slane %v938, 7
    %v954 = vrot.slane %v939, 6
    %v955 = vrot.slane %v940, 5
    %v956 = vrot.slane %v941, 4
    %v957 = vrot.slane %v942, 3
    %v958 = vrot.slane %v943, 2
    %v959 = vrot.slane %v944, 1
    %vm960 = vcmask 1040384
    %v961 = vsel %vm960, %v937, %v953
    %vm962 = vcmask 1042434
    %v963 = vsel %vm962, %v954, %v955
    %vm964 = vcmask 1041408
    %v965 = vsel %vm964, %v961, %v963
    %vm966 = vcmask 1044484
    %v967 = vsel %vm966, %v956, %v957
    %vm968 = vcmask 1046534
    %v969 = vsel %vm968, %v958, %v959
    %vm970 = vcmask 1045508
    %v971 = vsel %vm970, %v967, %v969
    %vm972 = vcmask 1043456
    %v973 = vsel %vm972, %v965, %v971
    %975 = vst [vmem:[#allocation3] sm:$0xff] %v973
    // Predicated region
    $region38: #{tpu_custom_call.1} parent=1 // pred_check
      _
    $region39: #{tpu_custom_call.1} parent=1 // pred_check_branch
      %977 = sbr.rel (0) target = $region41
    $region40: #{tpu_custom_call.1} parent=1 // pred_region
      %979 = vsyncadd [#allocation4], 0
      %s981 = sshll.u32 [#allocation3], 4
      %s982 = int_to_ptr.vmem [resolvable:$true] %s981
      %s983 = sshll.u32 %s9, 4
      %s984 = int_to_ptr.hbm [resolvable:$true] %s983
      %986 = dma.vmem_to_hbm [thread:$0]  %s982, 128, %s984, [#allocation4]
    $region41: #{tpu_custom_call.1} parent=1 // pred_fallthru
      _
    // Predicated region
    $region42: #{tpu_custom_call.1} parent=1 // pred_check
      _
    $region43: #{tpu_custom_call.1} parent=1 // pred_check_branch
      %988 = sbr.rel (0) target = $region45
    $region44: #{tpu_custom_call.1} parent=1 // pred_region
      %990 = dma.done [#allocation4], 128
    $region45: #{tpu_custom_call.1} parent=1 // pred_fallthru
      _
    %991 = vsyncpa [#allocation4], 1

</llo_original>
